<compile_context>
chip_gen: v6e
topology: v6e:2x2x1
jax: 0.10.0
libtpu: 0.0.40
codegen_flags: <defaults>
</compile_context>

<pallas_src>
import jax
import jax.numpy as jnp
from jax.experimental import pallas as pl
from jax.experimental.pallas import tpu as pltpu

_F32 = 4  # bytes


# ---------------------------------------------------------------------------
# Kernels
# ---------------------------------------------------------------------------

def scse_fused_kernel(x_ref, ws_ref, w1_ref, b1_ref, w2_ref, b2_ref, o_ref):
    """One batch tile (Bb, C, H*W): pooling, excitation and gating fused."""
    x = x_ref[...]                                            # (Bb, C, HW), native dtype
    bb, c, _ = x.shape

    # ---- channel excitation (GAB): global average pool + 2 tiny matmuls ----
    z = jnp.mean(x, axis=2, dtype=jnp.float32)                # (Bb, C) f32 accumulate
    h = jnp.dot(z, w1_ref[...], preferred_element_type=jnp.float32) + b1_ref[...]
    h = jnp.maximum(h, 0.0)                                   # (Bb, Cr)
    g = jnp.dot(h, w2_ref[...], preferred_element_type=jnp.float32) + b2_ref[...]
    g = jax.nn.sigmoid(g)                                     # (Bb, C) f32

    # ---- spatial squeeze (1x1 conv C -> 1, no bias) on the MXU ----
    # x already has the RHS layout (K=C on sublanes, N=HW on lanes).
    ws = jnp.broadcast_to(ws_ref[...].astype(x.dtype)[None], (bb, 1, c))
    s_logit = jnp.einsum("boc,bcl->bol", ws, x,
                         preferred_element_type=jnp.float32)  # (Bb, 1, HW) f32
    s = jax.nn.sigmoid(s_logit)                               # (Bb, 1, HW) f32

    # ---- combine: x * (s + g)  (one block-wide add + one block-wide mul) ----
    # Gating in x's native dtype; only pooling / excitation accumulate in f32.
    gate = s.astype(x.dtype) + g.astype(x.dtype)[:, :, None]  # (Bb, C, HW)
    o_ref[...] = x * gate


def scse_gate_kernel(x_ref, ws_ref, g_ref, o_ref):
    """Spatially tiled gating pass: block (1, C, Thw), channel gate precomputed."""
    x = x_ref[...]                                            # (1, C, Thw)
    bb, c, _ = x.shape
    ws = jnp.broadcast_to(ws_ref[...].astype(x.dtype)[None], (bb, 1, c))
    s = jax.nn.sigmoid(jnp.einsum("boc,bcl->bol", ws, x,
                                  preferred_element_type=jnp.float32))  # (1, 1, Thw)
    gate = s.astype(x.dtype) + g_ref[...].astype(x.dtype)[:, :, None]   # (1, C, Thw)
    o_ref[...] = x * gate


# ---------------------------------------------------------------------------
# Wrappers
# ---------------------------------------------------------------------------

def _usable_vmem_bytes():
    try:
        cap = int(pltpu.get_tpu_info().vmem_capacity_bytes)
    except Exception:
        cap = 64 << 20            # conservative fallback: v7x per-core VMEM
    # ~96 MiB usable on v5e/v6e (128 MiB physical), ~48 MiB on v7x (64 MiB).
    return (cap * 3) // 4


def _weight_bytes(C, Cr):
    # ws + w1 + b1 + w2 + b2, f32, x2 for (worst-case) double buffering.
    return 2 * _F32 * (C + C * Cr + Cr + Cr * C + C)


def _scse_two_pass(x, ws, w1, b1, w2, b2, *, budget, usable):
    """Fallback when a single (1, C, H*W) block exceeds the VMEM budget.

    Pass 1 (plain XLA, tiny): global-average pool + excitation -> channel gate
    g (B, C).  Pass 2 (Pallas): spatially tiled gating with g and the spatial
    squeeze weight resident in VMEM.  Costs one extra HBM read of x.
    """
    B, C, HW = x.shape
    itemsize = jnp.dtype(x.dtype).itemsize

    # Pass 1: pooled excitation (negligible FLOPs / bytes).
    z = jnp.mean(x, axis=2, dtype=jnp.float32)                       # (B, C)
    h = jnp.maximum(z @ w1.astype(jnp.float32) + b1, 0.0)            # (B, Cr)
    g = jax.nn.sigmoid(h @ w2.astype(jnp.float32) + b2)              # (B, C) f32

    # Pass 2: pick a lane-aligned HW tile that fits the VMEM budget
    # (2x in + 2x out blocks + gate temp + f32 slack per element).
    per_lane_col = C * (5 * itemsize + _F32)
    t_cap = max(int((budget - (1 << 20)) // per_lane_col), 128)
    t_cap = (t_cap // 128) * 128
    if t_cap >= HW:
        t_hw = HW
    else:
        t_hw = 0
        for m in range(t_cap // 128, 0, -1):      # prefer a tile that divides HW
            if HW % (m * 128) == 0:
                t_hw = m * 128
                break
        if t_hw == 0:
            t_hw = t_cap                          # non-divisible: Pallas masks the tail
    n_t = pl.cdiv(HW, t_hw)

    vmem_limit = int(min(max(t_hw * per_lane_col + (2 << 20), 16 << 20), usable))

    return pl.pallas_call(
        scse_gate_kernel,
        out_shape=jax.ShapeDtypeStruct((B, C, HW), x.dtype),
        grid_spec=pltpu.PrefetchScalarGridSpec(
            num_scalar_prefetch=0,
            grid=(B, n_t),
            in_specs=[
                pl.BlockSpec((1, C, t_hw), lambda b, t: (b, 0, t)),
                pl.BlockSpec((1, C), lambda b, t: (0, 0)),   # ws resident
                pl.BlockSpec((1, C), lambda b, t: (b, 0)),   # per-image gate
            ],
            out_specs=pl.BlockSpec((1, C, t_hw), lambda b, t: (b, 0, t)),
        ),
        compiler_params=pltpu.CompilerParams(
            dimension_semantics=("parallel", "parallel"),
            vmem_limit_bytes=vmem_limit,
        ),
    )(x, ws, g)


def scse_forward(x_nchw, ws, w1, b1, w2, b2, *, vmem_block_budget_bytes=None):
    """SCse forward on NCHW input.

    x_nchw: (B, C, H, W)
    ws:     (1, C)   spatial-squeeze conv weight (PyTorch (1, C, 1, 1) reshaped)
    w1:     (C, Cr)  GAB conv1 weight (transposed, squeezed), b1: (1, Cr)
    w2:     (Cr, C)  GAB conv2 weight (transposed, squeezed), b2: (1, C)
    """
    B, C, H, W = x_nchw.shape
    Cr = w1.shape[1]
    HW = H * W

    # Free contiguous reshape: NCHW row-major == (B, C, H*W). No transpose.
    x = x_nchw.reshape(B, C, HW)
    # TODO(synk): for very small H*W (< 128, e.g. 7x7 maps) fold several images
    # onto the lane axis to avoid lane padding / masked stores; needs a
    # per-segment pooling variant and is left out here (extra HBM transpose
    # would otherwise defeat the memory-bound win).

    usable = _usable_vmem_bytes()
    budget = usable if vmem_block_budget_bytes is None else min(
        int(vmem_block_budget_bytes), usable)

    itemsize = jnp.dtype(x.dtype).itemsize
    # Per image in a block: 2x double-buffered input + 2x output (native dtype),
    # the (s + g) gate temporary (native dtype), and one f32-sized block of
    # slack for the f32 mean / matmul upcasts.
    per_image_fit = C * HW * (5 * itemsize + _F32)
    wbytes = _weight_bytes(C, Cr)

    # Keep >= 4 grid steps (>= 2 per v7x TensorCore) when the batch allows, so
    # both cores get work and each still double-buffers across iterations.
    min_steps = 4 if B >= 4 else (2 if B >= 2 else 1)
    bb = 0
    for d in range(1, B + 1):
        if B % d or B // d < min_steps:
            continue
        if d * per_image_fit + wbytes + (1 << 20) <= budget:
            bb = max(bb, d)

    if bb == 0:
        # Even a single (1, C, H*W) block does not fit: two-pass fallback.
        out = _scse_two_pass(x, ws, w1, b1, w2, b2, budget=budget, usable=usable)
        return out.reshape(B, C, H, W)

    vmem_limit = int(min(max(bb * per_image_fit + wbytes + (2 << 20), 16 << 20),
                         usable))

    grid = (B // bb,)
    out = pl.pallas_call(
        scse_fused_kernel,
        out_shape=jax.ShapeDtypeStruct((B, C, HW), x.dtype),
        grid_spec=pltpu.PrefetchScalarGridSpec(
            num_scalar_prefetch=0,
            grid=grid,
            in_specs=[
                pl.BlockSpec((bb, C, HW), lambda b: (b, 0, 0)),
                pl.BlockSpec((1, C), lambda b: (0, 0)),    # weights: constant maps
                pl.BlockSpec((C, Cr), lambda b: (0, 0)),   #  -> resident in VMEM
                pl.BlockSpec((1, Cr), lambda b: (0, 0)),
                pl.BlockSpec((Cr, C), lambda b: (0, 0)),
                pl.BlockSpec((1, C), lambda b: (0, 0)),
            ],
            out_specs=pl.BlockSpec((bb, C, HW), lambda b: (b, 0, 0)),
        ),
        compiler_params=pltpu.CompilerParams(
            dimension_semantics=("parallel",),
            vmem_limit_bytes=vmem_limit,
        ),
    )(x, ws, w1, b1, w2, b2)

    return out.reshape(B, C, H, W)


def scse_reference(x_nchw, ws, w1, b1, w2, b2):
    """Pure-JAX reference of the PyTorch SCse forward (NCHW semantics)."""
    xf = x_nchw.astype(jnp.float32)
    B, C, H, W = x_nchw.shape
    # spatial attention: 1x1 conv C->1 (no bias) + sigmoid, broadcast over channels
    s = jax.nn.sigmoid(jnp.einsum("bchw,c->bhw", xf, ws.reshape(C)))     # (B,H,W)
    satt = xf * s[:, None, :, :]
    # channel attention (GAB)
    z = jnp.mean(xf, axis=(2, 3))                                        # (B, C)
    h = jnp.maximum(z @ w1 + b1, 0.0)                                    # (B, Cr)
    g = jax.nn.sigmoid(h @ w2 + b2)                                      # (B, C)
    catt = xf * g[:, :, None, None]
    return (satt + catt).astype(x_nchw.dtype)


if __name__ == "__main__":
    # Small shapes consistent with the module: dim=8, GAB reduction=4 -> hidden=2.
    B, C, H, W = 2, 8, 16, 16
    reduction = 4
    Cr = C // reduction

    key = jax.random.PRNGKey(0)
    kx, ks, k1, k2, k3, k4 = jax.random.split(key, 6)

    x = jax.random.normal(kx, (B, C, H, W), dtype=jnp.float32)

    # Parameters in matmul form:
    #   satt.squeeze.weight (1, C, 1, 1)  -> ws (1, C)
    #   catt.conv1.weight   (Cr, C, 1, 1) -> w1 (C, Cr);  catt.conv1.bias -> b1 (1, Cr)
    #   catt.conv2.weight   (C, Cr, 1, 1) -> w2 (Cr, C);  catt.conv2.bias -> b2 (1, C)
    ws = 0.2 * jax.random.normal(ks, (1, C), dtype=jnp.float32)
    w1 = 0.1 * jax.random.normal(k1, (C, Cr), dtype=jnp.float32)
    b1 = 0.05 * jax.random.normal(k2, (1, Cr), dtype=jnp.float32)
    w2 = 0.1 * jax.random.normal(k3, (Cr, C), dtype=jnp.float32)
    b2 = 0.05 * jax.random.normal(k4, (1, C), dtype=jnp.float32)

    ref = scse_reference(x, ws, w1, b1, w2, b2)

    # Fused single-pass path (whole image per block, batch-parallel grid).
    out = jax.block_until_ready(scse_forward(x, ws, w1, b1, w2, b2))
    assert out.shape == (B, C, H, W), out.shape
    assert jnp.allclose(out, ref, atol=1e-5, rtol=1e-5), "fused path mismatch"

    # Force the two-pass spatially tiled fallback (tiny budget) and check it too.
    out2 = jax.block_until_ready(
        scse_forward(x, ws, w1, b1, w2, b2, vmem_block_budget_bytes=32 * 1024))
    assert jnp.allclose(out2, ref, atol=1e-5, rtol=1e-5), "two-pass path mismatch"

    print("KERNEL_OK")
</pallas_src>

<mosaic_0001>
module attributes {stable_mosaic.version = 11 : i64} {
  func.func @scse_fused_kernel(%arg0: i32, %arg1: memref<1x8x256xf32, #tpu.memory_space<vmem>>, %arg2: memref<1x8xf32, #tpu.memory_space<vmem>>, %arg3: memref<8x2xf32, #tpu.memory_space<vmem>>, %arg4: memref<1x2xf32, #tpu.memory_space<vmem>>, %arg5: memref<2x8xf32, #tpu.memory_space<vmem>>, %arg6: memref<1x8xf32, #tpu.memory_space<vmem>>, %arg7: memref<1x8x256xf32, #tpu.memory_space<vmem>>) attributes {dimension_semantics = [#tpu.dimension_semantics<parallel>], iteration_bounds = array<i64: 2>, scalar_prefetch = 0 : i64, scratch_operands = 0 : i64, tpu.core_type = #tpu.core_type<tc>, window_params = [{transform_indices = @transform_0, window_bounds = array<i64: 1, 8, 256>}, {pipeline_mode = #tpu.pipeline_mode<synchronous>, transform_indices = @transform_1, window_bounds = array<i64: 1, 8>}, {pipeline_mode = #tpu.pipeline_mode<synchronous>, transform_indices = @transform_2, window_bounds = array<i64: 8, 2>}, {pipeline_mode = #tpu.pipeline_mode<synchronous>, transform_indices = @transform_3, window_bounds = array<i64: 1, 2>}, {pipeline_mode = #tpu.pipeline_mode<synchronous>, transform_indices = @transform_4, window_bounds = array<i64: 2, 8>}, {pipeline_mode = #tpu.pipeline_mode<synchronous>, transform_indices = @transform_5, window_bounds = array<i64: 1, 8>}, {transform_indices = @transform_6, window_bounds = array<i64: 1, 8, 256>}]} {
    %c0 = arith.constant 0 : index
    %c0_0 = arith.constant 0 : index
    %c0_1 = arith.constant 0 : index
    %0 = vector.load %arg1[%c0, %c0_0, %c0_1] : memref<1x8x256xf32, #tpu.memory_space<vmem>>, vector<1x8x256xf32>
    %cst = arith.constant dense<0.000000e+00> : vector<1x8xf32>
    %1 = vector.multi_reduction <add>, %0, %cst [2] : vector<1x8x256xf32> to vector<1x8xf32>
    %cst_2 = arith.constant 2.560000e+02 : f32
    %2 = vector.broadcast %cst_2 : f32 to vector<1x8xf32>
    %3 = arith.divf %1, %2 : vector<1x8xf32>
    %c0_3 = arith.constant 0 : index
    %c0_4 = arith.constant 0 : index
    %4 = vector.load %arg3[%c0_3, %c0_4] : memref<8x2xf32, #tpu.memory_space<vmem>>, vector<8x2xf32>
    %cst_5 = arith.constant dense<0.000000e+00> : vector<1x2xf32>
    %5 = tpu.matmul %3, %4, %cst_5 {dimension_numbers = #tpu.dot_dimension_numbers<[1], [0], [0], [1], [0, 0, 1, 1], [], []>} : vector<1x8xf32>, vector<8x2xf32>, vector<1x2xf32> -> vector<1x2xf32>
    %c0_6 = arith.constant 0 : index
    %c0_7 = arith.constant 0 : index
    %6 = vector.load %arg4[%c0_6, %c0_7] : memref<1x2xf32, #tpu.memory_space<vmem>>, vector<1x2xf32>
    %7 = arith.addf %5, %6 : vector<1x2xf32>
    %cst_8 = arith.constant 0.000000e+00 : f32
    %8 = vector.broadcast %cst_8 : f32 to vector<1x2xf32>
    %9 = arith.maximumf %7, %8 : vector<1x2xf32>
    %c0_9 = arith.constant 0 : index
    %c0_10 = arith.constant 0 : index
    %10 = vector.load %arg5[%c0_9, %c0_10] : memref<2x8xf32, #tpu.memory_space<vmem>>, vector<2x8xf32>
    %cst_11 = arith.constant dense<0.000000e+00> : vector<1x8xf32>
    %11 = tpu.matmul %9, %10, %cst_11 {dimension_numbers = #tpu.dot_dimension_numbers<[1], [0], [0], [1], [0, 0, 1, 1], [], []>} : vector<1x2xf32>, vector<2x8xf32>, vector<1x8xf32> -> vector<1x8xf32>
    %c0_12 = arith.constant 0 : index
    %c0_13 = arith.constant 0 : index
    %12 = vector.load %arg6[%c0_12, %c0_13] : memref<1x8xf32, #tpu.memory_space<vmem>>, vector<1x8xf32>
    %13 = arith.addf %11, %12 : vector<1x8xf32>
    %14 = arith.negf %13 : vector<1x8xf32>
    %15 = math.exp %14 : vector<1x8xf32>
    %cst_14 = arith.constant 1.000000e+00 : f32
    %16 = vector.broadcast %cst_14 : f32 to vector<1x8xf32>
    %17 = arith.addf %16, %15 : vector<1x8xf32>
    %18 = arith.divf %16, %17 : vector<1x8xf32>
    %c0_15 = arith.constant 0 : index
    %c0_16 = arith.constant 0 : index
    %19 = vector.load %arg2[%c0_15, %c0_16] : memref<1x8xf32, #tpu.memory_space<vmem>>, vector<1x8xf32>
    %20 = vector.shape_cast %19 : vector<1x8xf32> to vector<1x1x8xf32>
    "tpu.trace_start"() <{level = 10 : i32, message = "boc,bcl->bol"}> : () -> ()
    %cst_17 = arith.constant dense<0.000000e+00> : vector<1x1x256xf32>
    %21 = tpu.matmul %20, %0, %cst_17 {dimension_numbers = #tpu.dot_dimension_numbers<[2], [1], [1], [2], [0, 0, 0, 1, 1, 2], [0], [0]>} : vector<1x1x8xf32>, vector<1x8x256xf32>, vector<1x1x256xf32> -> vector<1x1x256xf32>
    "tpu.trace_stop"() : () -> ()
    %22 = arith.negf %21 : vector<1x1x256xf32>
    %23 = math.exp %22 : vector<1x1x256xf32>
    %cst_18 = arith.constant 1.000000e+00 : f32
    %24 = vector.broadcast %cst_18 : f32 to vector<1x1x256xf32>
    %25 = arith.addf %24, %23 : vector<1x1x256xf32>
    %26 = arith.divf %24, %25 : vector<1x1x256xf32>
    %27 = vector.shape_cast %18 : vector<1x8xf32> to vector<1x8x1xf32>
    %28 = vector.broadcast %26 : vector<1x1x256xf32> to vector<1x8x256xf32>
    %29 = vector.broadcast %27 : vector<1x8x1xf32> to vector<1x8x256xf32>
    %30 = arith.addf %28, %29 : vector<1x8x256xf32>
    %31 = arith.mulf %0, %30 : vector<1x8x256xf32>
    %c0_19 = arith.constant 0 : index
    %c0_20 = arith.constant 0 : index
    %c0_21 = arith.constant 0 : index
    %32 = vector.load %arg7[%c0_19, %c0_20, %c0_21] : memref<1x8x256xf32, #tpu.memory_space<vmem>>, vector<1x8x256xf32>
    tpu.vector_store %arg7[%c0_19, %c0_20, %c0_21], %31 {strides = array<i32>} : memref<1x8x256xf32, #tpu.memory_space<vmem>>, vector<1x8x256xf32>,
    return
  }
  func.func @transform_0(%arg0: i32) -> (i32, i32, i32) {
    %c0_i32 = arith.constant 0 : i32
    %c0_i32_0 = arith.constant 0 : i32
    %c0_i32_1 = arith.constant 0 : i32
    return %arg0, %c0_i32, %c0_i32_0 : i32, i32, i32
  }
  func.func @transform_1(%arg0: i32) -> (i32, i32) {
    %c0_i32 = arith.constant 0 : i32
    %c0_i32_0 = arith.constant 0 : i32
    %c0_i32_1 = arith.constant 0 : i32
    return %c0_i32, %c0_i32_0 : i32, i32
  }
  func.func @transform_2(%arg0: i32) -> (i32, i32) {
    %c0_i32 = arith.constant 0 : i32
    %c0_i32_0 = arith.constant 0 : i32
    %c0_i32_1 = arith.constant 0 : i32
    return %c0_i32, %c0_i32_0 : i32, i32
  }
  func.func @transform_3(%arg0: i32) -> (i32, i32) {
    %c0_i32 = arith.constant 0 : i32
    %c0_i32_0 = arith.constant 0 : i32
    %c0_i32_1 = arith.constant 0 : i32
    return %c0_i32, %c0_i32_0 : i32, i32
  }
  func.func @transform_4(%arg0: i32) -> (i32, i32) {
    %c0_i32 = arith.constant 0 : i32
    %c0_i32_0 = arith.constant 0 : i32
    %c0_i32_1 = arith.constant 0 : i32
    return %c0_i32, %c0_i32_0 : i32, i32
  }
  func.func @transform_5(%arg0: i32) -> (i32, i32) {
    %c0_i32 = arith.constant 0 : i32
    %c0_i32_0 = arith.constant 0 : i32
    %c0_i32_1 = arith.constant 0 : i32
    return %c0_i32, %c0_i32_0 : i32, i32
  }
  func.func @transform_6(%arg0: i32) -> (i32, i32, i32) {
    %c0_i32 = arith.constant 0 : i32
    %c0_i32_0 = arith.constant 0 : i32
    %c0_i32_1 = arith.constant 0 : i32
    return %arg0, %c0_i32, %c0_i32_0 : i32, i32, i32
  }
}

</mosaic_0001>

<llo_original>
// kernel: tpu_custom_call.1
$region0: #{tpu_custom_call.1}
  #allocation0 [shape = 'u32[]', space=smem, size = 0x4, offset = 0x4, fixed_abs, tag = 'smem constant byte address 0x4 - core index']
  #allocation1 [shape = 'u32[144,128]{1,0:T(1,128)}', space=vmem, size = 0x12000, scoped, tag = 'internal scratch']
  %s0 = inlined_call_operand.hbm [shape: f32[2,8,256], index: 0, kind: input, shape index: {}]
  %s1 = inlined_call_operand.vmem [shape: f32[1,8], index: 1, kind: input, shape index: {}]
  %s2 = inlined_call_operand.vmem [shape: f32[8,2], index: 2, kind: input, shape index: {}]
  %s3 = inlined_call_operand.vmem [shape: f32[1,2], index: 3, kind: input, shape index: {}]
  %s4 = inlined_call_operand.vmem [shape: f32[2,8], index: 4, kind: input, shape index: {}]
  %s5 = inlined_call_operand.vmem [shape: f32[1,8], index: 5, kind: input, shape index: {}]
  %s6 = inlined_call_operand.hbm [shape: f32[2,8,256], index: 6, kind: output, shape index: {}]
  %s7 = sld [smem:[#allocation0]]
  $region61: #{tpu_custom_call.1} parent=0
    _
  %s9 = ssub.s32 1, %s7
  %s10 = scalar_select 0, %s9, %s7
  $region1: #{tpu_custom_call.1} parent=0
    #allocation2 [shape = 'u8[16384]{0}', space=vmem, size = 0x4000, scoped, tag = 'input window, operand 0']
    #allocation3 [shape = 's32[2]{0}', space=sflag, size = 0x8, scoped, tag = 'scoped memory for tpu_custom_call.1']
    #allocation4 [shape = 's32[2]{0}', space=sflag, size = 0x8, scoped, tag = 'scoped memory for tpu_custom_call.1']
    #allocation5 [shape = 'u8[16384]{0}', space=vmem, size = 0x4000, scoped, tag = 'output window, operand 0']
    %11 = vsyncpa [#allocation3], 0
    %s12 = scalar_lea.sflag [#allocation3], 1
    %13 = vsyncpa %s12, 0
    %14 = vsyncpa [#allocation4], 0
    %s15 = scalar_lea.sflag [#allocation4], 1
    %16 = vsyncpa %s15, 0
    loop: start=0, step=1, limit=4
    $region2: #{tpu_custom_call.1} parent=1 // loop_pre_header
      _
    $region3: #{tpu_custom_call.1} parent=1 // loop_header
      %s18 = sphi 0, %s22
      %p19 = scmp.ge.s32.totalorder %s18, 4
      %s28 = sphi 0, %s30
      %s31 = sphi 0, %s28
      %s32 = sphi 0, %s31
      %s48 = sphi 0, %s32
      %s52 = sphi 0, %s52
      %s54 = sphi 0, %s52
      %s55 = sphi 0, %s54
      %s69 = sphi 0, %s55
      %s73 = sphi 0, %s73
      %s75 = sphi 0, %s73
      %s76 = sphi 0, %s75
      %s90 = sphi 0, %s76
      %s94 = sphi 0, %s94
      %s96 = sphi 0, %s94
      %s97 = sphi 0, %s96
      %s111 = sphi 0, %s97
      %s115 = sphi 0, %s115
      %s117 = sphi 0, %s115
      %s118 = sphi 0, %s117
      %s132 = sphi 0, %s118
      %s136 = sphi 0, %s136
      %s138 = sphi 0, %s136
      %s139 = sphi 0, %s138
      %s153 = sphi 0, %s139
      %s159 = sphi 0, %s161
      %s162 = sphi 0, %s159
      %s163 = sphi 0, %s162
      %s179 = sphi 0, %s163
    $region4: #{tpu_custom_call.1} parent=1 // loop_header_branch
      %21 = sbr.rel (%p19) target = $region8
    $region5: #{tpu_custom_call.1} parent=1 // loop_body
      %s23 = ssub.s32 %s18, 1
      %s24 = ssub.s32 %s18, 2
      %s25 = sadd.s32 %s18, 1
      %s26 = ssub.s32 %s18, %s25
      %p27 = scmp.eq.s32.totalorder %s26, 0
      %s29 = sadd.s32 %s28, 1
      %s30 = scalar_select %p27, %s28, %s29
      %p33 = pneg %p27
      %p34 = scmp.eq.s32.totalorder %s18, 1
      %p35 = por %p33, %p34
      %p36 = scmp.ne.s32.totalorder %s28, %s31
      %p37 = scmp.eq.s32.totalorder %s18, 0
      %p38 = por %p36, %p37
      %p39 = scmp.ne.s32.totalorder %s28, %s31
      %p40 = scmp.eq.s32.totalorder %s23, 1
      %p41 = por %p39, %p40
      %p42 = scmp.ne.s32.totalorder %s31, %s32
      %p43 = scmp.eq.s32.totalorder %s23, 0
      %p44 = por %p42, %p43
      %p45 = scmp.ne.s32.totalorder %s31, %s32
      %p46 = scmp.eq.s32.totalorder %s24, 1
      %p47 = por %p45, %p46
      %p49 = scmp.ne.s32.totalorder %s32, %s48
      %p50 = scmp.eq.s32.totalorder %s24, 0
      %p51 = por %p49, %p50
      %s53 = sadd.s32 %s52, 1
      %p56 = scmp.eq.s32.totalorder %s18, 1
      %p57 = scmp.ne.s32.totalorder %s52, %s54
      %p58 = scmp.eq.s32.totalorder %s18, 0
      %p59 = por %p57, %p58
      %p60 = scmp.ne.s32.totalorder %s52, %s54
      %p61 = scmp.eq.s32.totalorder %s23, 1
      %p62 = por %p60, %p61
      %p63 = scmp.ne.s32.totalorder %s54, %s55
      %p64 = scmp.eq.s32.totalorder %s23, 0
      %p65 = por %p63, %p64
      %p66 = scmp.ne.s32.totalorder %s54, %s55
      %p67 = scmp.eq.s32.totalorder %s24, 1
      %p68 = por %p66, %p67
      %p70 = scmp.ne.s32.totalorder %s55, %s69
      %p71 = scmp.eq.s32.totalorder %s24, 0
      %p72 = por %p70, %p71
      %s74 = sadd.s32 %s73, 1
      %p77 = scmp.eq.s32.totalorder %s18, 1
      %p78 = scmp.ne.s32.totalorder %s73, %s75
      %p79 = scmp.eq.s32.totalorder %s18, 0
      %p80 = por %p78, %p79
      %p81 = scmp.ne.s32.totalorder %s73, %s75
      %p82 = scmp.eq.s32.totalorder %s23, 1
      %p83 = por %p81, %p82
      %p84 = scmp.ne.s32.totalorder %s75, %s76
      %p85 = scmp.eq.s32.totalorder %s23, 0
      %p86 = por %p84, %p85
      %p87 = scmp.ne.s32.totalorder %s75, %s76
      %p88 = scmp.eq.s32.totalorder %s24, 1
      %p89 = por %p87, %p88
      %p91 = scmp.ne.s32.totalorder %s76, %s90
      %p92 = scmp.eq.s32.totalorder %s24, 0
      %p93 = por %p91, %p92
      %s95 = sadd.s32 %s94, 1
      %p98 = scmp.eq.s32.totalorder %s18, 1
      %p99 = scmp.ne.s32.totalorder %s94, %s96
      %p100 = scmp.eq.s32.totalorder %s18, 0
      %p101 = por %p99, %p100
      %p102 = scmp.ne.s32.totalorder %s94, %s96
      %p103 = scmp.eq.s32.totalorder %s23, 1
      %p104 = por %p102, %p103
      %p105 = scmp.ne.s32.totalorder %s96, %s97
      %p106 = scmp.eq.s32.totalorder %s23, 0
      %p107 = por %p105, %p106
      %p108 = scmp.ne.s32.totalorder %s96, %s97
      %p109 = scmp.eq.s32.totalorder %s24, 1
      %p110 = por %p108, %p109
      %p112 = scmp.ne.s32.totalorder %s97, %s111
      %p113 = scmp.eq.s32.totalorder %s24, 0
      %p114 = por %p112, %p113
      %s116 = sadd.s32 %s115, 1
      %p119 = scmp.eq.s32.totalorder %s18, 1
      %p120 = scmp.ne.s32.totalorder %s115, %s117
      %p121 = scmp.eq.s32.totalorder %s18, 0
      %p122 = por %p120, %p121
      %p123 = scmp.ne.s32.totalorder %s115, %s117
      %p124 = scmp.eq.s32.totalorder %s23, 1
      %p125 = por %p123, %p124
      %p126 = scmp.ne.s32.totalorder %s117, %s118
      %p127 = scmp.eq.s32.totalorder %s23, 0
      %p128 = por %p126, %p127
      %p129 = scmp.ne.s32.totalorder %s117, %s118
      %p130 = scmp.eq.s32.totalorder %s24, 1
      %p131 = por %p129, %p130
      %p133 = scmp.ne.s32.totalorder %s118, %s132
      %p134 = scmp.eq.s32.totalorder %s24, 0
      %p135 = por %p133, %p134
      %s137 = sadd.s32 %s136, 1
      %p140 = scmp.eq.s32.totalorder %s18, 1
      %p141 = scmp.ne.s32.totalorder %s136, %s138
      %p142 = scmp.eq.s32.totalorder %s18, 0
      %p143 = por %p141, %p142
      %p144 = scmp.ne.s32.totalorder %s136, %s138
      %p145 = scmp.eq.s32.totalorder %s23, 1
      %p146 = por %p144, %p145
      %p147 = scmp.ne.s32.totalorder %s138, %s139
      %p148 = scmp.eq.s32.totalorder %s23, 0
      %p149 = por %p147, %p148
      %p150 = scmp.ne.s32.totalorder %s138, %s139
      %p151 = scmp.eq.s32.totalorder %s24, 1
      %p152 = por %p150, %p151
      %p154 = scmp.ne.s32.totalorder %s139, %s153
      %p155 = scmp.eq.s32.totalorder %s24, 0
      %p156 = por %p154, %p155
      %s157 = ssub.s32 %s18, %s25
      %p158 = scmp.eq.s32.totalorder %s157, 0
      %s160 = sadd.s32 %s159, 1
      %s161 = scalar_select %p158, %s159, %s160
      %p164 = pneg %p158
      %p165 = scmp.eq.s32.totalorder %s18, 1
      %p166 = por %p164, %p165
      %p167 = scmp.ne.s32.totalorder %s159, %s162
      %p168 = scmp.eq.s32.totalorder %s18, 0
      %p169 = por %p167, %p168
      %p170 = scmp.ne.s32.totalorder %s159, %s162
      %p171 = scmp.eq.s32.totalorder %s23, 1
      %p172 = por %p170, %p171
      %p173 = scmp.ne.s32.totalorder %s162, %s163
      %p174 = scmp.eq.s32.totalorder %s23, 0
      %p175 = por %p173, %p174
      %p176 = scmp.ne.s32.totalorder %s162, %s163
      %p177 = scmp.eq.s32.totalorder %s24, 1
      %p178 = por %p176, %p177
      %p180 = scmp.ne.s32.totalorder %s163, %s179
      %p181 = scmp.eq.s32.totalorder %s24, 0
      %p182 = por %p180, %p181
      %p183 = scmp.le.s32.totalorder 1, %s18
      %p184 = scmp.lt.s32.totalorder %s18, 3
      %p185 = pnand %p183, %p184
      %p186 = pneg %p185
      // Predicated region
      $region9: #{tpu_custom_call.1} parent=5 // pred_check
        _
      $region10: #{tpu_custom_call.1} parent=5 // pred_check_branch
        %188 = sbr.rel (%p185) target = $region12
      $region11: #{tpu_custom_call.1} parent=5 // pred_region
        %s189 = ssub.s32 %s18, 1
        // Predicated region
        $region13: #{tpu_custom_call.1} parent=11 // pred_check
          %p190 = pneg %p65
        $region14: #{tpu_custom_call.1} parent=11 // pred_check_branch
          %192 = sbr.rel (%p190) target = $region16
        $region15: #{tpu_custom_call.1} parent=11 // pred_region
          _
        $region16: #{tpu_custom_call.1} parent=11 // pred_fallthru
          _
        // Predicated region
        $region17: #{tpu_custom_call.1} parent=11 // pred_check
          %p193 = pneg %p86
        $region18: #{tpu_custom_call.1} parent=11 // pred_check_branch
          %195 = sbr.rel (%p193) target = $region20
        $region19: #{tpu_custom_call.1} parent=11 // pred_region
          _
        $region20: #{tpu_custom_call.1} parent=11 // pred_fallthru
          _
        // Predicated region
        $region21: #{tpu_custom_call.1} parent=11 // pred_check
          %p196 = pneg %p107
        $region22: #{tpu_custom_call.1} parent=11 // pred_check_branch
          %198 = sbr.rel (%p196) target = $region24
        $region23: #{tpu_custom_call.1} parent=11 // pred_region
          _
        $region24: #{tpu_custom_call.1} parent=11 // pred_fallthru
          _
        // Predicated region
        $region25: #{tpu_custom_call.1} parent=11 // pred_check
          %p199 = pneg %p128
        $region26: #{tpu_custom_call.1} parent=11 // pred_check_branch
          %201 = sbr.rel (%p199) target = $region28
        $region27: #{tpu_custom_call.1} parent=11 // pred_region
          _
        $region28: #{tpu_custom_call.1} parent=11 // pred_fallthru
          _
        // Predicated region
        $region29: #{tpu_custom_call.1} parent=11 // pred_check
          %p202 = pneg %p149
        $region30: #{tpu_custom_call.1} parent=11 // pred_check_branch
          %204 = sbr.rel (%p202) target = $region32
        $region31: #{tpu_custom_call.1} parent=11 // pred_region
          _
        $region32: #{tpu_custom_call.1} parent=11 // pred_fallthru
          _
      $region12: #{tpu_custom_call.1} parent=5 // pred_fallthru
        _
      %p205 = scmp.lt.s32.totalorder %s18, 2
      // Predicated region
      $region33: #{tpu_custom_call.1} parent=5 // pred_check
        %p206 = pneg %p205
      $region34: #{tpu_custom_call.1} parent=5 // pred_check_branch
        %208 = sbr.rel (%p206) target = $region36
      $region35: #{tpu_custom_call.1} parent=5 // pred_region
        // Predicated region
        $region37: #{tpu_custom_call.1} parent=35 // pred_check
          %p209 = pneg %p38
        $region38: #{tpu_custom_call.1} parent=35 // pred_check_branch
          %211 = sbr.rel (%p209) target = $region40
        $region39: #{tpu_custom_call.1} parent=35 // pred_region
          %s212 = sand.u32 %s28, 1
          %s213 = scalar_lea.sflag [#allocation3], %s212
          %s214 = sand.u32 %s28, 1
          %s215 = smul.addr %s214, 16
          %s216 = scalar_lea.vmem [#allocation2], %s215
          %s218 = ssub.s32 256, 256
          %219 = vsyncadd %s213, %s218
          %s220 = smul.addr %s18, 2
          %s221 = smul.addr %s220, 128
          %s222 = scalar_lea.hbm %s0, %s221
          %s224 = sshll.u32 %s216, 4
          %s225 = int_to_ptr.vmem [resolvable:$true] %s224
          %227 = dma.hbm_to_vmem [thread:$0]  %s222, 256, %s225, %s213
        $region40: #{tpu_custom_call.1} parent=35 // pred_fallthru
          _
      $region36: #{tpu_custom_call.1} parent=5 // pred_fallthru
        _
      %p228 = scmp.le.s32.totalorder 1, %s18
      %p229 = scmp.lt.s32.totalorder %s18, 3
      %p230 = pnand %p228, %p229
      %p231 = pneg %p230
      // Predicated region
      $region41: #{tpu_custom_call.1} parent=5 // pred_check
        _
      $region42: #{tpu_custom_call.1} parent=5 // pred_check_branch
        %233 = sbr.rel (%p230) target = $region44
      $region43: #{tpu_custom_call.1} parent=5 // pred_region
        %s234 = ssub.s32 %s18, 1
        %s235 = sand.u32 %s31, 1
        %s236 = scalar_lea.sflag [#allocation3], %s235
        %s237 = sand.u32 %s31, 1
        %s238 = smul.addr %s237, 16
        %s239 = scalar_lea.vmem [#allocation2], %s238
        // Predicated region
        $region45: #{tpu_custom_call.1} parent=43 // pred_check
          %p240 = pneg %p44
        $region46: #{tpu_custom_call.1} parent=43 // pred_check_branch
          %242 = sbr.rel (%p240) target = $region48
        $region47: #{tpu_custom_call.1} parent=43 // pred_region
          %243 = dma.done %s236, 256
        $region48: #{tpu_custom_call.1} parent=43 // pred_fallthru
          _
        %s244 = sand.u32 %s31, 1
        %s245 = scalar_lea.sflag [#allocation3], %s244
        %s246 = sand.u32 %s31, 1
        %s247 = smul.addr %s246, 16
        %s248 = scalar_lea.vmem [#allocation2], %s247
        %p249 = pneg %p44
        %p250 = pneg %p41
        %p251 = pneg %p65
        %p252 = pneg %p62
        %p253 = pneg %p86
        %p254 = pneg %p83
        %p255 = pneg %p107
        %p256 = pneg %p104
        %p257 = pneg %p128
        %p258 = pneg %p125
        %p259 = pneg %p149
        %p260 = pneg %p146
        %p261 = pneg %p175
        %p262 = pneg %p172
        %s263 = sand.u32 %s162, 1
        %s264 = scalar_lea.sflag [#allocation4], %s263
        %s265 = sand.u32 %s162, 1
        %s266 = smul.addr %s265, 16
        %s267 = scalar_lea.vmem [#allocation5], %s266
        %v268 = vld [vmem:[%s239] sm:$0xff]
        %v269 = vld [vmem:[%s239 + $0x8] sm:$0xff]
        %v270 = vadd.f32 %v268, %v269
        %271 = vadd.xlane.f32.xlu0 %v270
        %v272 = vpop.xlane.xlu0 %271
        %v273 = vrcp.pop 256.0
        %v274 = vmul.f32 %v272, %v273
        %v275 = vld [vmem:[%s2] sm:$0xff]
        %v276 = vld [vmem:[%s3] sm:$0x1]
        %v278 = vlaneseq
        %v279 = vand.u32 %v278, 127
        %v280 = vlaneseq
        %v281 = vshrl.u32 %v280, 7
        %v282 = vsub.s32 %v279, %v281
        %v283 = vrot.slane %v274, %v282
        %vm284 = vcmask 64512
        %v285 = vsel %vm284, %v283, 0
        %287 = vmatprep.subr.mxu0 0.0
        %288 = vmatpush1.msra.mxu0 0.0
        %289 = vmatprep.subr.mxu0 0.0
        %290 = vmatpush1.msra.mxu0 0.0
        %291 = vmatprep.subr.mxu0 0.0
        %292 = vmatpush1.msra.mxu0 0.0
        %293 = vmatprep.subr.mxu0 0.0
        %294 = vmatpush1.msra.mxu0 0.0
        %295 = vmatprep.subr.mxu0 0.0
        %296 = vmatpush1.msra.mxu0 0.0
        %297 = vmatprep.subr.mxu0 0.0
        %298 = vmatpush1.msra.mxu0 0.0
        %299 = vmatprep.subr.mxu0 0.0
        %300 = vmatpush1.msra.mxu0 0.0
        %301 = vmatprep.subr.mxu0 0.0
        %302 = vmatpush1.msra.mxu0 0.0
        %303 = vmatprep.subr.mxu0 0.0
        %304 = vmatpush1.msra.mxu0 0.0
        %305 = vmatprep.subr.mxu0 0.0
        %306 = vmatpush1.msra.mxu0 0.0
        %307 = vmatprep.subr.mxu0 0.0
        %308 = vmatpush1.msra.mxu0 0.0
        %309 = vmatprep.subr.mxu0 0.0
        %310 = vmatpush1.msra.mxu0 0.0
        %311 = vmatprep.subr.mxu0 0.0
        %312 = vmatpush1.msra.mxu0 0.0
        %313 = vmatprep.subr.mxu0 0.0
        %314 = vmatpush1.msra.mxu0 0.0
        %315 = vmatprep.subr.mxu0 0.0
        %316 = vmatpush1.msra.mxu0 0.0
        %317 = vmatprep.subr.mxu0 0.0
        %318 = vmatpush1.msra.mxu0 %v275
        %319 = vmatprep.subr.mxu0 0.0
        %320 = vmatpush2.msra.mxu0 0.0
        %321 = vmatprep.subr.mxu0 0.0
        %322 = vmatpush2.msra.mxu0 0.0
        %323 = vmatprep.subr.mxu0 0.0
        %324 = vmatpush2.msra.mxu0 0.0
        %325 = vmatprep.subr.mxu0 0.0
        %326 = vmatpush2.msra.mxu0 0.0
        %327 = vmatprep.subr.mxu0 0.0
        %328 = vmatpush2.msra.mxu0 0.0
        %329 = vmatprep.subr.mxu0 0.0
        %330 = vmatpush2.msra.mxu0 0.0
        %331 = vmatprep.subr.mxu0 0.0
        %332 = vmatpush2.msra.mxu0 0.0
        %333 = vmatprep.subr.mxu0 0.0
        %334 = vmatpush2.msra.mxu0 0.0
        %335 = vmatprep.subr.mxu0 0.0
        %336 = vmatpush2.msra.mxu0 0.0
        %337 = vmatprep.subr.mxu0 0.0
        %338 = vmatpush2.msra.mxu0 0.0
        %339 = vmatprep.subr.mxu0 0.0
        %340 = vmatpush2.msra.mxu0 0.0
        %341 = vmatprep.subr.mxu0 0.0
        %342 = vmatpush2.msra.mxu0 0.0
        %343 = vmatprep.subr.mxu0 0.0
        %344 = vmatpush2.msra.mxu0 0.0
        %345 = vmatprep.subr.mxu0 0.0
        %346 = vmatpush2.msra.mxu0 0.0
        %347 = vmatprep.subr.mxu0 0.0
        %348 = vmatpush2.msra.mxu0 0.0
        %349 = vmatprep.subr.mxu0 0.0
        %350 = vmatpush2.msra.mxu0 0.0
        %351 = vmatprep.mubr.f32.mxu0 0.0
        %352 = vmatmul.mubr.f32.gmra.mxu0 %v285
        %v353 = vpop.f32.mrf.mxu0
        %v354 = vadd.f32 %v276, %v353
        %v355 = vpop.f32.mrf.mxu0
        %356 = vdwg.mxu0
        %v357 = vmax.f32 %v354, 0.0
        %v358 = vld [vmem:[%s4] sm:$0x3]
        %v359 = vld [vmem:[%s5] sm:$0x1]
        %vm360 = vcmask 15360
        %v362 = vsel %vm360, %v357, 0
        %vm364 = vcmask 1041408
        %v366 = vsel %vm364, %v358, 0
        %368 = vmatprep.subr.mxu0 0.0
        %369 = vmatpush1.msra.mxu0 0.0
        %370 = vmatprep.subr.mxu0 0.0
        %371 = vmatpush1.msra.mxu0 0.0
        %372 = vmatprep.subr.mxu0 0.0
        %373 = vmatpush1.msra.mxu0 0.0
        %374 = vmatprep.subr.mxu0 0.0
        %375 = vmatpush1.msra.mxu0 0.0
        %376 = vmatprep.subr.mxu0 0.0
        %377 = vmatpush1.msra.mxu0 0.0
        %378 = vmatprep.subr.mxu0 0.0
        %379 = vmatpush1.msra.mxu0 0.0
        %380 = vmatprep.subr.mxu0 0.0
        %381 = vmatpush1.msra.mxu0 0.0
        %382 = vmatprep.subr.mxu0 0.0
        %383 = vmatpush1.msra.mxu0 0.0
        %384 = vmatprep.subr.mxu0 0.0
        %385 = vmatpush1.msra.mxu0 0.0
        %386 = vmatprep.subr.mxu0 0.0
        %387 = vmatpush1.msra.mxu0 0.0
        %388 = vmatprep.subr.mxu0 0.0
        %389 = vmatpush1.msra.mxu0 0.0
        %390 = vmatprep.subr.mxu0 0.0
        %391 = vmatpush1.msra.mxu0 0.0
        %392 = vmatprep.subr.mxu0 0.0
        %393 = vmatpush1.msra.mxu0 0.0
        %394 = vmatprep.subr.mxu0 0.0
        %395 = vmatpush1.msra.mxu0 0.0
        %396 = vmatprep.subr.mxu0 0.0
        %397 = vmatpush1.msra.mxu0 0.0
        %398 = vmatprep.subr.mxu0 0.0
        %399 = vmatpush1.msra.mxu0 %v366
        %400 = vmatprep.subr.mxu0 0.0
        %401 = vmatpush2.msra.mxu0 0.0
        %402 = vmatprep.subr.mxu0 0.0
        %403 = vmatpush2.msra.mxu0 0.0
        %404 = vmatprep.subr.mxu0 0.0
        %405 = vmatpush2.msra.mxu0 0.0
        %406 = vmatprep.subr.mxu0 0.0
        %407 = vmatpush2.msra.mxu0 0.0
        %408 = vmatprep.subr.mxu0 0.0
        %409 = vmatpush2.msra.mxu0 0.0
        %410 = vmatprep.subr.mxu0 0.0
        %411 = vmatpush2.msra.mxu0 0.0
        %412 = vmatprep.subr.mxu0 0.0
        %413 = vmatpush2.msra.mxu0 0.0
        %414 = vmatprep.subr.mxu0 0.0
        %415 = vmatpush2.msra.mxu0 0.0
        %416 = vmatprep.subr.mxu0 0.0
        %417 = vmatpush2.msra.mxu0 0.0
        %418 = vmatprep.subr.mxu0 0.0
        %419 = vmatpush2.msra.mxu0 0.0
        %420 = vmatprep.subr.mxu0 0.0
        %421 = vmatpush2.msra.mxu0 0.0
        %422 = vmatprep.subr.mxu0 0.0
        %423 = vmatpush2.msra.mxu0 0.0
        %424 = vmatprep.subr.mxu0 0.0
        %425 = vmatpush2.msra.mxu0 0.0
        %426 = vmatprep.subr.mxu0 0.0
        %427 = vmatpush2.msra.mxu0 0.0
        %428 = vmatprep.subr.mxu0 0.0
        %429 = vmatpush2.msra.mxu0 0.0
        %430 = vmatprep.subr.mxu0 0.0
        %431 = vmatpush2.msra.mxu0 0.0
        %432 = vmatprep.mubr.f32.mxu0 0.0
        %433 = vmatmul.mubr.f32.gmra.mxu0 %v362
        %v434 = vpop.f32.mrf.mxu0
        %v435 = vadd.f32 %v359, %v434
        %v436 = vpop.f32.mrf.mxu0
        %437 = vdwg.mxu0
        %v438 = vxor.u32 %v435, 2147483648
        %v439 = vmul.f32 %v438, 1.442695
        %v440 = vpow.pop %v439
        %v441 = vadd.f32 %v440, 1.0
        %v442 = vrcp.pop %v441
        %v443 = vmul.f32 1.0, %v442
        %v444 = vld [vmem:[%s1] sm:$0x1]
        %v446 = vsel %vm284, %v444, 0
        %448 = vmatprep.subr.mxu0 0.0
        %449 = vmatpush1.msra.mxu0 0.0
        %450 = vmatprep.subr.mxu0 0.0
        %451 = vmatpush1.msra.mxu0 0.0
        %452 = vmatprep.subr.mxu0 0.0
        %453 = vmatpush1.msra.mxu0 0.0
        %454 = vmatprep.subr.mxu0 0.0
        %455 = vmatpush1.msra.mxu0 0.0
        %456 = vmatprep.subr.mxu0 0.0
        %457 = vmatpush1.msra.mxu0 0.0
        %458 = vmatprep.subr.mxu0 0.0
        %459 = vmatpush1.msra.mxu0 0.0
        %460 = vmatprep.subr.mxu0 0.0
        %461 = vmatpush1.msra.mxu0 0.0
        %462 = vmatprep.subr.mxu0 0.0
        %463 = vmatpush1.msra.mxu0 0.0
        %464 = vmatprep.subr.mxu0 0.0
        %465 = vmatpush1.msra.mxu0 0.0
        %466 = vmatprep.subr.mxu0 0.0
        %467 = vmatpush1.msra.mxu0 0.0
        %468 = vmatprep.subr.mxu0 0.0
        %469 = vmatpush1.msra.mxu0 0.0
        %470 = vmatprep.subr.mxu0 0.0
        %471 = vmatpush1.msra.mxu0 0.0
        %472 = vmatprep.subr.mxu0 0.0
        %473 = vmatpush1.msra.mxu0 0.0
        %474 = vmatprep.subr.mxu0 0.0
        %475 = vmatpush1.msra.mxu0 0.0
        %476 = vmatprep.subr.mxu0 0.0
        %477 = vmatpush1.msra.mxu0 0.0
        %478 = vmatprep.subr.mxu0 %v269
        %479 = vmatpush1.msra.mxu0 %v268
        %480 = vmatprep.subr.mxu0 0.0
        %481 = vmatpush2.msra.mxu0 0.0
        %482 = vmatprep.subr.mxu0 0.0
        %483 = vmatpush2.msra.mxu0 0.0
        %484 = vmatprep.subr.mxu0 0.0
        %485 = vmatpush2.msra.mxu0 0.0
        %486 = vmatprep.subr.mxu0 0.0
        %487 = vmatpush2.msra.mxu0 0.0
        %488 = vmatprep.subr.mxu0 0.0
        %489 = vmatpush2.msra.mxu0 0.0
        %490 = vmatprep.subr.mxu0 0.0
        %491 = vmatpush2.msra.mxu0 0.0
        %492 = vmatprep.subr.mxu0 0.0
        %493 = vmatpush2.msra.mxu0 0.0
        %494 = vmatprep.subr.mxu0 0.0
        %495 = vmatpush2.msra.mxu0 0.0
        %496 = vmatprep.subr.mxu0 0.0
        %497 = vmatpush2.msra.mxu0 0.0
        %498 = vmatprep.subr.mxu0 0.0
        %499 = vmatpush2.msra.mxu0 0.0
        %500 = vmatprep.subr.mxu0 0.0
        %501 = vmatpush2.msra.mxu0 0.0
        %502 = vmatprep.subr.mxu0 0.0
        %503 = vmatpush2.msra.mxu0 0.0
        %504 = vmatprep.subr.mxu0 0.0
        %505 = vmatpush2.msra.mxu0 0.0
        %506 = vmatprep.subr.mxu0 0.0
        %507 = vmatpush2.msra.mxu0 0.0
        %508 = vmatprep.subr.mxu0 0.0
        %509 = vmatpush2.msra.mxu0 0.0
        %510 = vmatprep.subr.mxu0 0.0
        %511 = vmatpush2.msra.mxu0 0.0
        %512 = vmatprep.mubr.f32.mxu0 0.0
        %513 = vmatmul.mubr.f32.gmra.mxu0 %v446
        %v514 = vpop.f32.mrf.mxu0
        %v515 = vadd.f32 0.0, %v514
        %v516 = vpop.f32.mrf.mxu0
        %v517 = vadd.f32 0.0, %v516
        %518 = vdwg.mxu0
        %v519 = vxor.u32 %v515, 2147483648
        %v520 = vxor.u32 %v517, 2147483648
        %v521 = vmul.f32 %v519, 1.442695
        %v522 = vpow.pop %v521
        %v523 = vmul.f32 %v520, 1.442695
        %v524 = vpow.pop %v523
        %v525 = vadd.f32 %v522, 1.0
        %v526 = vadd.f32 %v524, 1.0
        %v527 = vrcp.pop %v525
        %v528 = vmul.f32 1.0, %v527
        %v529 = vrcp.pop %v526
        %v530 = vmul.f32 1.0, %v529
        %v531 = vlaneseq
        %v532 = vshrl.u32 %v531, 7
        %v533 = vsub.s32 0, %v532
        %v534 = vrot.slane %v443, %v533
        %536 = vbcast.lane.b32.xlu0 %v534, 256
        %v537 = vpop.permute.xlu0 %536
        %v538 = vlaneseq
        %v539 = vshrl.u32 %v538, 7
        %v540 = vsub.s32 0, %v539
        %v541 = vrot.slane %v528, %v540
        %v542 = vlaneseq
        %v543 = vshrl.u32 %v542, 7
        %v544 = vsub.s32 0, %v543
        %v545 = vrot.slane %v530, %v544
        %v546 = vadd.f32 %v541, %v537
        %v547 = vadd.f32 %v545, %v537
        %v548 = vmul.f32 %v268, %v546
        %v549 = vmul.f32 %v269, %v547
        %550 = vst [vmem:[%s267] sm:$0xff] %v548
        %551 = vst [vmem:[%s267 + $0x8] sm:$0xff] %v549
        %s552 = sand.u32 %s162, 1
        %s553 = scalar_lea.sflag [#allocation4], %s552
        %s554 = sand.u32 %s162, 1
        %s555 = smul.addr %s554, 16
        %s556 = scalar_lea.vmem [#allocation5], %s555
        // Predicated region
        $region49: #{tpu_custom_call.1} parent=43 // pred_check
          %p557 = pneg %p172
        $region50: #{tpu_custom_call.1} parent=43 // pred_check_branch
          %559 = sbr.rel (%p557) target = $region52
        $region51: #{tpu_custom_call.1} parent=43 // pred_region
          %s561 = ssub.s32 256, 256
          %562 = vsyncadd %s553, %s561
          %s563 = smul.addr %s23, 2
          %s564 = smul.addr %s563, 128
          %s565 = scalar_lea.hbm %s6, %s564
          %s567 = sshll.u32 %s556, 4
          %s568 = int_to_ptr.vmem [resolvable:$true] %s567
          %570 = dma.vmem_to_hbm [thread:$0]  %s568, 256, %s565, %s553
        $region52: #{tpu_custom_call.1} parent=43 // pred_fallthru
          _
      $region44: #{tpu_custom_call.1} parent=5 // pred_fallthru
        _
      %p571 = scmp.le.s32.totalorder 2, %s18
      // Predicated region
      $region53: #{tpu_custom_call.1} parent=5 // pred_check
        %p572 = pneg %p571
      $region54: #{tpu_custom_call.1} parent=5 // pred_check_branch
        %574 = sbr.rel (%p572) target = $region56
      $region55: #{tpu_custom_call.1} parent=5 // pred_region
        %s575 = ssub.s32 %s18, 2
        // Predicated region
        $region57: #{tpu_custom_call.1} parent=55 // pred_check
          %p576 = pneg %p178
        $region58: #{tpu_custom_call.1} parent=55 // pred_check_branch
          %578 = sbr.rel (%p576) target = $region60
        $region59: #{tpu_custom_call.1} parent=55 // pred_region
          %s579 = sand.u32 %s163, 1
          %s580 = scalar_lea.sflag [#allocation4], %s579
          %s581 = sand.u32 %s163, 1
          %s582 = smul.addr %s581, 16
          %s583 = scalar_lea.vmem [#allocation5], %s582
          %584 = dma.done %s580, 256
        $region60: #{tpu_custom_call.1} parent=55 // pred_fallthru
          _
      $region56: #{tpu_custom_call.1} parent=5 // pred_fallthru
        _
    $region6: #{tpu_custom_call.1} parent=1 // loop_footer
      %s22 = sadd.s32 1, %s18
    $region7: #{tpu_custom_call.1} parent=1 // loop_footer_branch
      %17 = sbr.rel target = $region3
    $region8: #{tpu_custom_call.1} parent=1 // loop_exit
      _
    %585 = vsyncpa [#allocation3], 1
    %s586 = scalar_lea.sflag [#allocation3], 1
    %587 = vsyncpa %s586, 1
    %588 = vsyncpa [#allocation4], 1
    %s589 = scalar_lea.sflag [#allocation4], 1
    %590 = vsyncpa %s589, 1

</llo_original>
